<compile_context>
chip_gen: v6e
topology: v6e:2x2x1
jax: 0.10.0
libtpu: 0.0.40
codegen_flags: <defaults>
</compile_context>

<pallas_src>
import jax
import jax.numpy as jnp
from jax.experimental import pallas as pl
from jax.experimental.pallas import tpu as pltpu


# ----------------------------------------------------------------------------
# Fused kernel:
#   lstm = tanh(mean_t(sequence) @ Wp + bp)            (stand-in LSTM-CNN head)
#   out  = cat([lstm, bert], 1) @ Wc + bc              (EnsembleModel classifier)
# All contractions are VPU broadcast mul-adds / lane reductions (no MXU).
# ----------------------------------------------------------------------------
def fused_ensemble_kernel(seq_ref, bert_ref, wpt_ref, bp_ref, wc_ref, bc_ref,
                          out_ref):
    # seq_ref : [TM, T, H]  sequence tile
    # bert_ref: [TM, 2]     bert stand-in output tile
    # wpt_ref : [2, H]      projection weight, pre-transposed
    # bp_ref  : [1, 2]      projection bias
    # wc_ref  : [4, 2]      classifier weight (in=4, out=2)
    # bc_ref  : [1, 2]      classifier bias
    # out_ref : [TM, 2]     logits tile

    # ---- stand-in LSTM-CNN head: mean-pool over time, project H->2, tanh ----
    pooled = jnp.mean(seq_ref[...], axis=1)                    # [TM, H]
    wpt = wpt_ref[...]                                         # [2, H]
    bp = bp_ref[...]                                           # [1, 2]
    # H-contraction as VPU multiply + XLU lane reduce (N=2 is pathological for MXU).
    l0 = jnp.tanh(jnp.sum(pooled * wpt[0:1, :], axis=-1, keepdims=True)
                  + bp[:, 0:1])                                # [TM, 1]
    l1 = jnp.tanh(jnp.sum(pooled * wpt[1:2, :], axis=-1, keepdims=True)
                  + bp[:, 1:2])                                # [TM, 1]

    bert = bert_ref[...]                                       # [TM, 2]
    b0 = bert[:, 0:1]                                          # [TM, 1]
    b1 = bert[:, 1:2]                                          # [TM, 1]

    # ---- classifier: concat folded into split broadcast FMAs (pure VPU) -----
    wc = wc_ref[...]                                           # [4, 2]
    out_ref[...] = (l0 * wc[0:1, :] + l1 * wc[1:2, :]
                    + b0 * wc[2:3, :] + b1 * wc[3:4, :]
                    + bc_ref[...])                             # [TM, 2]


def ensemble_forward(sequence, bert_output, w_proj, b_proj, w_cls, b_cls,
                     *, tm=None):
    """Fused EnsembleModel forward (LSTM-CNN head + classifier) in one kernel.

    sequence:    [B, T, H]  input to the stand-in LSTM-CNN head
    bert_output: [B, 2]     output of the external BERT stand-in
    w_proj:      [H, 2]     head projection weight (y = x @ Wp + bp)
    b_proj:      [2]        head projection bias
    w_cls:       [4, 2]     classifier weight (y = x @ Wc + bc)
    b_cls:       [2]        classifier bias
    """
    B, T, H = sequence.shape
    if tm is None:
        # Batch tile: large enough to pipeline well, small enough for v7x's
        # 64 MiB VMEM (2 buffers per input).
        tm = min(B, 512)

    # Pre-transpose the projection weight so the per-output-row select inside
    # the kernel is a sublane slice (no lane<->sublane transpose).
    wpt = jnp.transpose(w_proj).astype(jnp.float32)            # [2, H]

    grid = (pl.cdiv(B, tm),)
    return pl.pallas_call(
        fused_ensemble_kernel,
        out_shape=jax.ShapeDtypeStruct((B, 2), jnp.float32),
        grid=grid,
        in_specs=[
            pl.BlockSpec((tm, T, H), lambda i: (i, 0, 0)),     # sequence tile
            pl.BlockSpec((tm, 2),    lambda i: (i, 0)),        # bert tile
            pl.BlockSpec((2, H),     lambda i: (0, 0)),        # resident weights
            pl.BlockSpec((1, 2),     lambda i: (0, 0)),
            pl.BlockSpec((4, 2),     lambda i: (0, 0)),
            pl.BlockSpec((1, 2),     lambda i: (0, 0)),
        ],
        out_specs=pl.BlockSpec((tm, 2), lambda i: (i, 0)),
        compiler_params=pltpu.CompilerParams(
            dimension_semantics=("parallel",)),                # megacore on v7x
    )(sequence.astype(jnp.float32),
      bert_output.astype(jnp.float32),
      wpt,
      b_proj.reshape(1, 2).astype(jnp.float32),
      w_cls.astype(jnp.float32),
      b_cls.reshape(1, 2).astype(jnp.float32))


# ----------------------------------------------------------------------------
# Deterministic stand-in for the external BERT sub-model.
# ----------------------------------------------------------------------------
def simulate_bert(key, batch):
    # TODO(synk): BERT model + HuggingFace tokenizer on raw `text` have no
    # Pallas equivalent; emit a deterministic stand-in [B, 2] "bert_output".
    return jax.random.normal(key, (batch, 2), dtype=jnp.float32)


if __name__ == "__main__":
    key = jax.random.PRNGKey(0)
    k_seq, k_bert, k_wl, k_bl, k_wc, k_bc = jax.random.split(key, 6)

    # Small shapes implied by the forward: batch=2, seq=8, hidden=32,
    # each sub-model produces 2 features -> combined 4 -> Linear(4, 2).
    B, T, H = 2, 8, 32

    sequence = jax.random.normal(k_seq, (B, T, H), dtype=jnp.float32)

    # Stand-in LSTM-CNN head parameters.
    w_proj = jax.random.normal(k_wl, (H, 2), dtype=jnp.float32) * 0.1
    b_proj = jax.random.normal(k_bl, (2,), dtype=jnp.float32) * 0.1

    # EnsembleModel classifier parameters: Linear(4, 2), stored [in, out].
    w_cls = jax.random.normal(k_wc, (4, 2), dtype=jnp.float32) * 0.5
    b_cls = jax.random.normal(k_bc, (2,), dtype=jnp.float32) * 0.1

    bert_output = simulate_bert(k_bert, B)                     # [B, 2]

    logits = ensemble_forward(sequence, bert_output,
                              w_proj, b_proj, w_cls, b_cls)
    jax.block_until_ready(logits)

    # Plain-JAX reference of the same fused path.
    pooled = jnp.mean(sequence, axis=1)
    lstm_output = jnp.tanh(pooled @ w_proj + b_proj)           # [B, 2]
    ref = jnp.concatenate([lstm_output, bert_output], axis=1) @ w_cls + b_cls

    assert logits.shape == (B, 2)
    assert jnp.allclose(logits, ref, atol=1e-5, rtol=1e-5)

    print("KERNEL_OK")
</pallas_src>

<mosaic_0001>
module attributes {stable_mosaic.version = 11 : i64} {
  func.func @fused_ensemble_kernel(%arg0: i32, %arg1: memref<2x8x32xf32, #tpu.memory_space<vmem>>, %arg2: memref<2x2xf32, #tpu.memory_space<vmem>>, %arg3: memref<2x32xf32, #tpu.memory_space<vmem>>, %arg4: memref<1x2xf32, #tpu.memory_space<vmem>>, %arg5: memref<4x2xf32, #tpu.memory_space<vmem>>, %arg6: memref<1x2xf32, #tpu.memory_space<vmem>>, %arg7: memref<2x2xf32, #tpu.memory_space<vmem>>) attributes {dimension_semantics = [#tpu.dimension_semantics<parallel>], iteration_bounds = array<i64: 1>, scalar_prefetch = 0 : i64, scratch_operands = 0 : i64, tpu.core_type = #tpu.core_type<tc>, window_params = [{transform_indices = @transform_0, window_bounds = array<i64: 2, 8, 32>}, {transform_indices = @transform_1, window_bounds = array<i64: 2, 2>}, {pipeline_mode = #tpu.pipeline_mode<synchronous>, transform_indices = @transform_2, window_bounds = array<i64: 2, 32>}, {pipeline_mode = #tpu.pipeline_mode<synchronous>, transform_indices = @transform_3, window_bounds = array<i64: 1, 2>}, {pipeline_mode = #tpu.pipeline_mode<synchronous>, transform_indices = @transform_4, window_bounds = array<i64: 4, 2>}, {pipeline_mode = #tpu.pipeline_mode<synchronous>, transform_indices = @transform_5, window_bounds = array<i64: 1, 2>}, {transform_indices = @transform_6, window_bounds = array<i64: 2, 2>}]} {
    %c0 = arith.constant 0 : index
    %c0_0 = arith.constant 0 : index
    %c0_1 = arith.constant 0 : index
    %0 = vector.load %arg1[%c0, %c0_0, %c0_1] : memref<2x8x32xf32, #tpu.memory_space<vmem>>, vector<2x8x32xf32>
    %cst = arith.constant dense<0.000000e+00> : vector<2x32xf32>
    %1 = vector.multi_reduction <add>, %0, %cst [1] : vector<2x8x32xf32> to vector<2x32xf32>
    %cst_2 = arith.constant 8.000000e+00 : f32
    %2 = vector.broadcast %cst_2 : f32 to vector<2x32xf32>
    %3 = arith.divf %1, %2 : vector<2x32xf32>
    %c0_3 = arith.constant 0 : index
    %c0_4 = arith.constant 0 : index
    %4 = vector.load %arg3[%c0_3, %c0_4] : memref<2x32xf32, #tpu.memory_space<vmem>>, vector<2x32xf32>
    %c0_5 = arith.constant 0 : index
    %c0_6 = arith.constant 0 : index
    %5 = vector.load %arg4[%c0_5, %c0_6] : memref<1x2xf32, #tpu.memory_space<vmem>>, vector<1x2xf32>
    %6 = vector.extract_strided_slice %4 {offsets = [0, 0], sizes = [1, 32], strides = [1, 1]} : vector<2x32xf32> to vector<1x32xf32>
    %7 = vector.broadcast %6 : vector<1x32xf32> to vector<2x32xf32>
    %8 = arith.mulf %3, %7 : vector<2x32xf32>
    %cst_7 = arith.constant dense<0.000000e+00> : vector<2xf32>
    %9 = vector.multi_reduction <add>, %8, %cst_7 [1] : vector<2x32xf32> to vector<2xf32>
    %10 = vector.shape_cast %9 : vector<2xf32> to vector<2x1xf32>
    %11 = vector.extract_strided_slice %5 {offsets = [0, 0], sizes = [1, 1], strides = [1, 1]} : vector<1x2xf32> to vector<1x1xf32>
    %12 = vector.broadcast %11 : vector<1x1xf32> to vector<2x1xf32>
    %13 = arith.addf %10, %12 : vector<2x1xf32>
    %14 = math.tanh %13 : vector<2x1xf32>
    %15 = vector.extract_strided_slice %4 {offsets = [1, 0], sizes = [1, 32], strides = [1, 1]} : vector<2x32xf32> to vector<1x32xf32>
    %16 = vector.broadcast %15 : vector<1x32xf32> to vector<2x32xf32>
    %17 = arith.mulf %3, %16 : vector<2x32xf32>
    %cst_8 = arith.constant dense<0.000000e+00> : vector<2xf32>
    %18 = vector.multi_reduction <add>, %17, %cst_8 [1] : vector<2x32xf32> to vector<2xf32>
    %19 = vector.shape_cast %18 : vector<2xf32> to vector<2x1xf32>
    %20 = vector.extract_strided_slice %5 {offsets = [0, 1], sizes = [1, 1], strides = [1, 1]} : vector<1x2xf32> to vector<1x1xf32>
    %21 = vector.broadcast %20 : vector<1x1xf32> to vector<2x1xf32>
    %22 = arith.addf %19, %21 : vector<2x1xf32>
    %23 = math.tanh %22 : vector<2x1xf32>
    %c0_9 = arith.constant 0 : index
    %c0_10 = arith.constant 0 : index
    %24 = vector.load %arg2[%c0_9, %c0_10] : memref<2x2xf32, #tpu.memory_space<vmem>>, vector<2x2xf32>
    %25 = vector.extract_strided_slice %24 {offsets = [0, 0], sizes = [2, 1], strides = [1, 1]} : vector<2x2xf32> to vector<2x1xf32>
    %26 = vector.extract_strided_slice %24 {offsets = [0, 1], sizes = [2, 1], strides = [1, 1]} : vector<2x2xf32> to vector<2x1xf32>
    %c0_11 = arith.constant 0 : index
    %c0_12 = arith.constant 0 : index
    %27 = vector.load %arg5[%c0_11, %c0_12] : memref<4x2xf32, #tpu.memory_space<vmem>>, vector<4x2xf32>
    %28 = vector.extract_strided_slice %27 {offsets = [0, 0], sizes = [1, 2], strides = [1, 1]} : vector<4x2xf32> to vector<1x2xf32>
    %29 = vector.broadcast %14 : vector<2x1xf32> to vector<2x2xf32>
    %30 = vector.broadcast %28 : vector<1x2xf32> to vector<2x2xf32>
    %31 = arith.mulf %29, %30 : vector<2x2xf32>
    %32 = vector.extract_strided_slice %27 {offsets = [1, 0], sizes = [1, 2], strides = [1, 1]} : vector<4x2xf32> to vector<1x2xf32>
    %33 = vector.broadcast %23 : vector<2x1xf32> to vector<2x2xf32>
    %34 = vector.broadcast %32 : vector<1x2xf32> to vector<2x2xf32>
    %35 = arith.mulf %33, %34 : vector<2x2xf32>
    %36 = arith.addf %31, %35 : vector<2x2xf32>
    %37 = vector.extract_strided_slice %27 {offsets = [2, 0], sizes = [1, 2], strides = [1, 1]} : vector<4x2xf32> to vector<1x2xf32>
    %38 = vector.broadcast %25 : vector<2x1xf32> to vector<2x2xf32>
    %39 = vector.broadcast %37 : vector<1x2xf32> to vector<2x2xf32>
    %40 = arith.mulf %38, %39 : vector<2x2xf32>
    %41 = arith.addf %36, %40 : vector<2x2xf32>
    %42 = vector.extract_strided_slice %27 {offsets = [3, 0], sizes = [1, 2], strides = [1, 1]} : vector<4x2xf32> to vector<1x2xf32>
    %43 = vector.broadcast %26 : vector<2x1xf32> to vector<2x2xf32>
    %44 = vector.broadcast %42 : vector<1x2xf32> to vector<2x2xf32>
    %45 = arith.mulf %43, %44 : vector<2x2xf32>
    %46 = arith.addf %41, %45 : vector<2x2xf32>
    %c0_13 = arith.constant 0 : index
    %c0_14 = arith.constant 0 : index
    %47 = vector.load %arg6[%c0_13, %c0_14] : memref<1x2xf32, #tpu.memory_space<vmem>>, vector<1x2xf32>
    %48 = vector.broadcast %47 : vector<1x2xf32> to vector<2x2xf32>
    %49 = arith.addf %46, %48 : vector<2x2xf32>
    %c0_15 = arith.constant 0 : index
    %c0_16 = arith.constant 0 : index
    %50 = vector.load %arg7[%c0_15, %c0_16] : memref<2x2xf32, #tpu.memory_space<vmem>>, vector<2x2xf32>
    tpu.vector_store %arg7[%c0_15, %c0_16], %49 {strides = array<i32>} : memref<2x2xf32, #tpu.memory_space<vmem>>, vector<2x2xf32>,
    return
  }
  func.func @transform_0(%arg0: i32) -> (i32, i32, i32) {
    %c0_i32 = arith.constant 0 : i32
    %c0_i32_0 = arith.constant 0 : i32
    %c0_i32_1 = arith.constant 0 : i32
    return %arg0, %c0_i32, %c0_i32_0 : i32, i32, i32
  }
  func.func @transform_1(%arg0: i32) -> (i32, i32) {
    %c0_i32 = arith.constant 0 : i32
    %c0_i32_0 = arith.constant 0 : i32
    return %arg0, %c0_i32 : i32, i32
  }
  func.func @transform_2(%arg0: i32) -> (i32, i32) {
    %c0_i32 = arith.constant 0 : i32
    %c0_i32_0 = arith.constant 0 : i32
    %c0_i32_1 = arith.constant 0 : i32
    return %c0_i32, %c0_i32_0 : i32, i32
  }
  func.func @transform_3(%arg0: i32) -> (i32, i32) {
    %c0_i32 = arith.constant 0 : i32
    %c0_i32_0 = arith.constant 0 : i32
    %c0_i32_1 = arith.constant 0 : i32
    return %c0_i32, %c0_i32_0 : i32, i32
  }
  func.func @transform_4(%arg0: i32) -> (i32, i32) {
    %c0_i32 = arith.constant 0 : i32
    %c0_i32_0 = arith.constant 0 : i32
    %c0_i32_1 = arith.constant 0 : i32
    return %c0_i32, %c0_i32_0 : i32, i32
  }
  func.func @transform_5(%arg0: i32) -> (i32, i32) {
    %c0_i32 = arith.constant 0 : i32
    %c0_i32_0 = arith.constant 0 : i32
    %c0_i32_1 = arith.constant 0 : i32
    return %c0_i32, %c0_i32_0 : i32, i32
  }
  func.func @transform_6(%arg0: i32) -> (i32, i32) {
    %c0_i32 = arith.constant 0 : i32
    %c0_i32_0 = arith.constant 0 : i32
    return %arg0, %c0_i32 : i32, i32
  }
}

</mosaic_0001>

<llo_original>
// kernel: tpu_custom_call.1
$region0: #{tpu_custom_call.1}
  #allocation0 [shape = 'u32[]', space=smem, size = 0x4, offset = 0x4, fixed_abs, tag = 'smem constant byte address 0x4 - core index']
  #allocation1 [shape = 'u32[144,128]{1,0:T(1,128)}', space=vmem, size = 0x12000, scoped, tag = 'internal scratch']
  %s0 = inlined_call_operand.hbm [shape: f32[2,8,32], index: 0, kind: input, shape index: {}]
  %s1 = inlined_call_operand.vmem [shape: f32[2,2], index: 1, kind: input, shape index: {}]
  %s2 = inlined_call_operand.vmem [shape: f32[2,32], index: 2, kind: input, shape index: {}]
  %s3 = inlined_call_operand.vmem [shape: f32[1,2], index: 3, kind: input, shape index: {}]
  %s4 = inlined_call_operand.vmem [shape: f32[4,2], index: 4, kind: input, shape index: {}]
  %s5 = inlined_call_operand.vmem [shape: f32[1,2], index: 5, kind: input, shape index: {}]
  %s6 = inlined_call_operand.hbm [shape: f32[2,2], index: 6, kind: output, shape index: {}]
  %s7 = sld [smem:[#allocation0]]
  $region38: #{tpu_custom_call.1} parent=0
    _
  %s9 = ssub.s32 1, %s7
  %s10 = scalar_select 0, %s9, %s7
  $region1: #{tpu_custom_call.1} parent=0
    #allocation2 [shape = 'u8[8192]{0}', space=vmem, size = 0x2000, scoped, tag = 'input window, operand 0, single buffered']
    #allocation3 [shape = 's32[1]{0}', space=sflag, size = 0x4, scoped, tag = 'scoped memory for tpu_custom_call.1']
    #allocation4 [shape = 's32[1]{0}', space=sflag, size = 0x4, scoped, tag = 'scoped memory for tpu_custom_call.1']
    #allocation5 [shape = 'u8[1024]{0}', space=vmem, size = 0x400, scoped, tag = 'output window, operand 0, single buffered']
    %11 = vsyncpa [#allocation3], 0
    %12 = vsyncpa [#allocation4], 0
    // Predicated region
    $region2: #{tpu_custom_call.1} parent=1 // pred_check
      _
    $region3: #{tpu_custom_call.1} parent=1 // pred_check_branch
      %14 = sbr.rel (0) target = $region5
    $region4: #{tpu_custom_call.1} parent=1 // pred_region
      %s16 = ssub.s32 256, 256
      %17 = vsyncadd [#allocation3], %s16
      %s18 = sshll.u32 [#allocation2], 4
      %s19 = int_to_ptr.vmem [resolvable:$true] %s18
      %24 = dma.hbm_to_vmem [thread:$0]  %s0, 256, %s19, [#allocation3], 128, 128, 8
    $region5: #{tpu_custom_call.1} parent=1 // pred_fallthru
      _
    // Predicated region
    $region6: #{tpu_custom_call.1} parent=1 // pred_check
      _
    $region7: #{tpu_custom_call.1} parent=1 // pred_check_branch
      %26 = sbr.rel (0) target = $region9
    $region8: #{tpu_custom_call.1} parent=1 // pred_region
      _
    $region9: #{tpu_custom_call.1} parent=1 // pred_fallthru
      _
    // Predicated region
    $region10: #{tpu_custom_call.1} parent=1 // pred_check
      _
    $region11: #{tpu_custom_call.1} parent=1 // pred_check_branch
      %28 = sbr.rel (0) target = $region13
    $region12: #{tpu_custom_call.1} parent=1 // pred_region
      _
    $region13: #{tpu_custom_call.1} parent=1 // pred_fallthru
      _
    // Predicated region
    $region14: #{tpu_custom_call.1} parent=1 // pred_check
      _
    $region15: #{tpu_custom_call.1} parent=1 // pred_check_branch
      %30 = sbr.rel (0) target = $region17
    $region16: #{tpu_custom_call.1} parent=1 // pred_region
      _
    $region17: #{tpu_custom_call.1} parent=1 // pred_fallthru
      _
    // Predicated region
    $region18: #{tpu_custom_call.1} parent=1 // pred_check
      _
    $region19: #{tpu_custom_call.1} parent=1 // pred_check_branch
      %32 = sbr.rel (0) target = $region21
    $region20: #{tpu_custom_call.1} parent=1 // pred_region
      _
    $region21: #{tpu_custom_call.1} parent=1 // pred_fallthru
      _
    // Predicated region
    $region22: #{tpu_custom_call.1} parent=1 // pred_check
      _
    $region23: #{tpu_custom_call.1} parent=1 // pred_check_branch
      %34 = sbr.rel (0) target = $region25
    $region24: #{tpu_custom_call.1} parent=1 // pred_region
      _
    $region25: #{tpu_custom_call.1} parent=1 // pred_fallthru
      _
    // Predicated region
    $region26: #{tpu_custom_call.1} parent=1 // pred_check
      _
    $region27: #{tpu_custom_call.1} parent=1 // pred_check_branch
      %36 = sbr.rel (0) target = $region29
    $region28: #{tpu_custom_call.1} parent=1 // pred_region
      %37 = dma.done [#allocation3], 256
    $region29: #{tpu_custom_call.1} parent=1 // pred_fallthru
      _
    %v38 = vld [vmem:[#allocation2] sm:$0xff]
    %v39 = vld [vmem:[#allocation2 + $0x8] sm:$0xff]
    %vm40 = vcmask 261120
    %v41 = vsel %vm40, %v38, 0.0
    %v42 = vrot.slane %v41, 4
    %v43 = vadd.f32 %v41, %v42
    %v44 = vrot.slane %v43, 2
    %v45 = vadd.f32 %v43, %v44
    %v46 = vrot.slane %v45, 1
    %v47 = vadd.f32 %v45, %v46
    %v48 = vsel %vm40, %v39, 0.0
    %v49 = vrot.slane %v48, 4
    %v50 = vadd.f32 %v48, %v49
    %v51 = vrot.slane %v50, 2
    %v52 = vadd.f32 %v50, %v51
    %v53 = vrot.slane %v52, 1
    %v54 = vadd.f32 %v52, %v53
    %v55 = vrcp.pop 8.0
    %v56 = vmul.f32 %v47, %v55
    %v57 = vmul.f32 %v54, %v55
    %v58 = vld [vmem:[%s2] sm:$0x3]
    %v59 = vld [vmem:[%s3] sm:$0x1]
    %v60 = vlaneseq
    %v61 = vshrl.u32 %v60, 7
    %v62 = vsub.s32 0, %v61
    %v63 = vrot.slane %v58, %v62
    %v64 = vmul.f32 %v56, %v63
    %v65 = vmul.f32 %v57, %v63
    %v68 = vrot.slane %v65, 7
    %vm69 = vcmask 1041409
    %v70 = vsel %vm69, %v68, %v64
    %vm72 = vcmask 254976
    %v73 = vsel %vm72, %v70, 0.0
    %74 = vadd.xlane.f32.xlu0 %v73
    %v75 = vpop.xlane.xlu0 %74
    %v77 = vlaneseq
    %v78 = vshrl.u32 %v77, 7
    %v79 = vsub.s32 0, %v78
    %v80 = vrot.slane %v59, %v79
    %v82 = vadd.f32 %v75, %v80
    %v83 = vtanh.pop %v82
    %v84 = vlaneseq
    %v85 = vshrl.u32 %v84, 7
    %v86 = vsub.s32 1, %v85
    %v87 = vrot.slane %v58, %v86
    %v88 = vmul.f32 %v56, %v87
    %v89 = vmul.f32 %v57, %v87
    %v92 = vrot.slane %v89, 7
    %v93 = vsel %vm69, %v92, %v88
    %v95 = vsel %vm72, %v93, 0.0
    %96 = vadd.xlane.f32.xlu0 %v95
    %v97 = vpop.xlane.xlu0 %96
    %v98 = vadd.f32 %v97, %v80
    %v99 = vtanh.pop %v98
    %v100 = vld [vmem:[%s1] sm:$0x3]
    %v101 = vld [vmem:[%s4] sm:$0xf]
    %103 = vset.pattern.permute.xlu0 0
    %104 = vperm.xlu0 %103, %v83
    %v105 = vpop.permute.xlu0 %104
    %v107 = vlaneseq
    %v108 = vshrl.u32 %v107, 7
    %v109 = vsub.s32 0, %v108
    %v110 = vrot.slane %v101, %v109
    %v111 = vmul.f32 %v105, %v110
    %113 = vset.pattern.permute.xlu0 1
    %114 = vperm.xlu0 %113, %v99
    %v115 = vpop.permute.xlu0 %114
    %v117 = vlaneseq
    %v118 = vshrl.u32 %v117, 7
    %v119 = vsub.s32 1, %v118
    %v120 = vrot.slane %v101, %v119
    %v121 = vmul.f32 %v115, %v120
    %v122 = vadd.f32 %v111, %v121
    %124 = vset.pattern.permute.xlu0 0
    %125 = vperm.xlu0 %124, %v100
    %v126 = vpop.permute.xlu0 %125
    %v128 = vlaneseq
    %v129 = vshrl.u32 %v128, 7
    %v130 = vsub.s32 2, %v129
    %v131 = vrot.slane %v101, %v130
    %v132 = vmul.f32 %v126, %v131
    %v133 = vadd.f32 %v122, %v132
    %134 = vset.pattern.permute.xlu0 1
    %135 = vperm.xlu0 %134, %v100
    %v136 = vpop.permute.xlu0 %135
    %v138 = vlaneseq
    %v139 = vshrl.u32 %v138, 7
    %v140 = vsub.s32 3, %v139
    %v141 = vrot.slane %v101, %v140
    %v142 = vmul.f32 %v136, %v141
    %v143 = vadd.f32 %v133, %v142
    %v144 = vld [vmem:[%s5] sm:$0x1]
    %v146 = vlaneseq
    %v147 = vshrl.u32 %v146, 7
    %v148 = vsub.s32 0, %v147
    %v149 = vrot.slane %v144, %v148
    %v151 = vadd.f32 %v143, %v149
    %vm152 = vcmask 9216
    %153 = vst.msk [vmem:[#allocation5] sm:$0x3] %vm152, %v151
    // Predicated region
    $region30: #{tpu_custom_call.1} parent=1 // pred_check
      _
    $region31: #{tpu_custom_call.1} parent=1 // pred_check_branch
      %155 = sbr.rel (0) target = $region33
    $region32: #{tpu_custom_call.1} parent=1 // pred_region
      %s157 = ssub.s32 32, 32
      %158 = vsyncadd [#allocation4], %s157
      %s160 = sshll.u32 [#allocation5], 4
      %s161 = int_to_ptr.vmem [resolvable:$true] %s160
      %163 = dma.vmem_to_hbm [thread:$0]  %s161, 32, %s6, [#allocation4]
    $region33: #{tpu_custom_call.1} parent=1 // pred_fallthru
      _
    // Predicated region
    $region34: #{tpu_custom_call.1} parent=1 // pred_check
      _
    $region35: #{tpu_custom_call.1} parent=1 // pred_check_branch
      %165 = sbr.rel (0) target = $region37
    $region36: #{tpu_custom_call.1} parent=1 // pred_region
      %166 = dma.done [#allocation4], 32
    $region37: #{tpu_custom_call.1} parent=1 // pred_fallthru
      _
    %167 = vsyncpa [#allocation3], 1
    %168 = vsyncpa [#allocation4], 1

</llo_original>
